<compile_context>
chip_gen: v7x
topology: tpu7x:2x2x1
jax: 0.10.0
libtpu: 0.0.40
codegen_flags: <defaults>
</compile_context>

<pallas_src>
import functools

import jax
import jax.numpy as jnp
from jax.experimental import pallas as pl
from jax.experimental.pallas import tpu as pltpu


def _round_up(x, m):
    return (x + m - 1) // m * m


def _vmem_cap_bytes():
    """Safe scoped-VMEM ceiling: 7/8 of physical VMEM, falling back to v7x's 64 MiB."""
    try:
        cap = int(pltpu.get_tpu_info().vmem_capacity_bytes)
    except Exception:
        cap = 64 * 1024 * 1024  # conservative: v7x physical VMEM per TC
    return (cap * 7) // 8


def _apply_activation(out, activation):
    if activation == "relu":
        return jnp.maximum(out, 0.0)
    if activation == "tanh":
        return jnp.tanh(out)
    if activation == "sigmoid":
        return jax.nn.sigmoid(out)
    if activation == "gelu":
        return jax.nn.gelu(out)
    return out  # identity


def _linear_act_kernel(x_ref, w_ref, b_ref, o_ref, acc_ref, *, activation, nk):
    """One (tm, tn) output tile; K (reduction) is the last ('arbitrary') grid axis.

    nk is the static number of K steps. The f32 accumulator lives in VMEM
    scratch; the epilogue (bias + activation + dtype cast) is fused with the
    final accumulation step so the output tile is stored exactly once.
    """
    prod = jnp.dot(x_ref[...], w_ref[...], preferred_element_type=jnp.float32)

    if nk == 1:
        # Single K step: no accumulator traffic at all.
        o_ref[...] = _apply_activation(prod + b_ref[...], activation).astype(o_ref.dtype)
    else:
        k = pl.program_id(2)

        @pl.when(k == 0)
        def _():
            acc_ref[...] = prod  # direct write: no zero-init store + reload

        @pl.when(jnp.logical_and(k > 0, k < nk - 1))
        def _():
            acc_ref[...] += prod

        @pl.when(k == nk - 1)
        def _():
            # Fused epilogue: one acc load, add final partial product + bias,
            # activation, single store to the output tile.
            out = acc_ref[...] + prod + b_ref[...]
            o_ref[...] = _apply_activation(out, activation).astype(o_ref.dtype)


def make_linear(w, b, *, activation="relu", use_bf16=False, tm=None, tn=None, tk=None):
    """Prepare (pad + cast) params ONCE and return fn(x) -> act(x @ w + b).

    w: (K, N)  -- transposed PyTorch weight
    b: (N,)
    use_bf16: cast x/w tiles to bf16 (f32 accumulation) for ~3-8x MXU throughput;
              off by default to match nn.Linear f32 numerics exactly.
    """
    K, N = w.shape
    assert b.shape == (N,)

    # MXU dtype for x / w (do NOT force-upcast the caller's dtype).
    in_dtype = jnp.bfloat16 if use_bf16 else w.dtype
    sub = 16 if in_dtype == jnp.bfloat16 else 8

    n_rounded = _round_up(N, 128)
    k_rounded = _round_up(K, 128)
    if tn is None:
        tn = min(512, n_rounded)
        # v7x has 2 TensorCores: keep >=2 parallel grid points when the layer
        # is wide enough so one core does not sit idle after tile growth.
        if tn == n_rounded and n_rounded >= 256:
            tn = _round_up(n_rounded // 2, 128)
    if tk is None:
        # Large tk cuts accumulator round-trips (acc traffic scales with K/tk).
        tk = min(1024, k_rounded)

    Np, Kp = _round_up(N, tn), _round_up(K, tk)
    nk = Kp // tk

    # Pad + cast weight / bias ONCE, outside the per-call hot path.
    wp = jnp.pad(w, ((0, Kp - K), (0, Np - N))) if (Kp != K or Np != N) else w
    wp = wp.astype(in_dtype)
    bp = jnp.pad(b, (0, Np - N)) if Np != N else b
    b2d = bp.reshape(1, Np).astype(jnp.float32)

    kernel = functools.partial(_linear_act_kernel, activation=activation, nk=nk)
    vmem_cap = _vmem_cap_bytes()

    def forward(x):
        M, Kx = x.shape
        assert Kx == K
        out_dtype = x.dtype

        tm_ = tm if tm is not None else min(512, _round_up(M, sub))
        Mp = _round_up(M, tm_)
        xp = jnp.pad(x, ((0, Mp - M), (0, Kp - K))) if (Mp != M or Kp != K) else x
        if xp.dtype != in_dtype:
            xp = xp.astype(in_dtype)

        in_bytes = jnp.dtype(in_dtype).itemsize
        out_bytes = jnp.dtype(out_dtype).itemsize
        tile_bytes = (
            2 * (tm_ * tk + tk * tn) * in_bytes  # double-buffered x / w tiles
            + 2 * tn * 4                         # bias
            + 2 * tm_ * tn * out_bytes           # output tile (double-buffered)
            + tm_ * tn * 4                       # f32 accumulator scratch
        )
        vmem_limit = int(min(max(2 * tile_bytes, 32 * 1024 * 1024), vmem_cap))

        grid = (Mp // tm_, Np // tn, nk)

        # TODO(synk): if profiling shows the bf16 path DMA-bound on v6e, add
        # pipeline_mode=pl.Buffered(3) on the weight BlockSpec and sweep 2 vs 3.
        out_padded = pl.pallas_call(
            kernel,
            out_shape=jax.ShapeDtypeStruct((Mp, Np), out_dtype),
            grid_spec=pltpu.PrefetchScalarGridSpec(
                num_scalar_prefetch=0,
                grid=grid,
                in_specs=[
                    pl.BlockSpec((tm_, tk), lambda i, j, k: (i, k)),   # x tile
                    pl.BlockSpec((tk, tn), lambda i, j, k: (k, j)),    # w tile
                    pl.BlockSpec((1, tn), lambda i, j, k: (0, j)),     # bias tile
                ],
                out_specs=pl.BlockSpec((tm_, tn), lambda i, j, k: (i, j)),
                scratch_shapes=[pltpu.VMEM((tm_, tn), jnp.float32)],
            ),
            compiler_params=pltpu.CompilerParams(
                dimension_semantics=("parallel", "parallel", "arbitrary"),
                vmem_limit_bytes=vmem_limit,
            ),
        )(xp, wp, b2d)

        return out_padded[:M, :N]

    return forward


def linear_forward(x, w, b, **kwargs):
    """One-off convenience wrapper: act(x @ w + b)."""
    return make_linear(w, b, **kwargs)(x)


def init_linear_params(key, in_size, out_size):
    """Deterministic init mirroring nn.Linear's uniform(-1/sqrt(in), 1/sqrt(in))."""
    kw, kb = jax.random.split(key)
    bound = 1.0 / jnp.sqrt(jnp.float32(in_size))
    # PyTorch weight is (out_size, in_size); we keep it transposed: (in_size, out_size)
    w = jax.random.uniform(kw, (in_size, out_size), jnp.float32, -bound, bound)
    b = jax.random.uniform(kb, (out_size,), jnp.float32, -bound, bound)
    return w, b


if __name__ == "__main__":
    # Module: Linear(in_size, out_size, activation) -> nn.Linear + activation()
    # Chosen activation: ReLU (the constructor takes the activation class as an arg).
    key = jax.random.PRNGKey(0)
    k_small, k_big = jax.random.split(key)

    # --- small shape matching the module spec (single-tile grid) ---
    batch, in_size, out_size = 8, 32, 64
    kx, kp = jax.random.split(k_small)
    x = jax.random.normal(kx, (batch, in_size), jnp.float32)
    w, b = init_linear_params(kp, in_size, out_size)

    out = jax.block_until_ready(linear_forward(x, w, b, activation="relu"))
    ref = jnp.maximum(jnp.dot(x, w, precision=jax.lax.Precision.HIGHEST) + b, 0.0)
    assert out.shape == (batch, out_size)
    assert out.dtype == x.dtype
    assert jnp.allclose(out, ref, atol=1e-4, rtol=1e-4)

    # --- larger shape exercising the multi-block (M, N, K) grid, K padding,
    #     and the multi-step accumulator (tk=256 -> 3 K steps for K=640) ---
    M2, K2, N2 = 512, 640, 384
    kx2, kp2 = jax.random.split(k_big)
    x2 = jax.random.normal(kx2, (M2, K2), jnp.float32)
    w2, b2 = init_linear_params(kp2, K2, N2)

    linear_big = make_linear(w2, b2, activation="relu", tk=256)  # weights padded once
    out2 = jax.block_until_ready(linear_big(x2))
    ref2 = jnp.maximum(jnp.dot(x2, w2, precision=jax.lax.Precision.HIGHEST) + b2, 0.0)
    assert out2.shape == (M2, N2)
    assert jnp.allclose(out2, ref2, atol=1e-3, rtol=1e-3)

    # --- bf16 MXU path (opt-in, f32 accumulation): looser tolerance vs f32 ref ---
    linear_bf16 = make_linear(w2, b2, activation="relu", use_bf16=True)
    out3 = jax.block_until_ready(linear_bf16(x2))
    assert out3.shape == (M2, N2)
    assert out3.dtype == x2.dtype
    assert bool(jnp.all(jnp.isfinite(out3)))
    assert jnp.allclose(out3, ref2, atol=1e-1, rtol=1e-1)

    print("KERNEL_OK")
</pallas_src>

<mosaic_0001>
module attributes {stable_mosaic.version = 11 : i64} {
  func.func @_linear_act_kernel(%arg0: i32, %arg1: i32, %arg2: i32, %arg3: memref<8x128xf32, #tpu.memory_space<vmem>>, %arg4: memref<128x128xf32, #tpu.memory_space<vmem>>, %arg5: memref<1x128xf32, #tpu.memory_space<vmem>>, %arg6: memref<8x128xf32, #tpu.memory_space<vmem>>, %arg7: memref<8x128xf32, #tpu.memory_space<vmem>>) attributes {dimension_semantics = [#tpu.dimension_semantics<parallel>, #tpu.dimension_semantics<parallel>, #tpu.dimension_semantics<arbitrary>], iteration_bounds = array<i64: 1, 1, 1>, scalar_prefetch = 0 : i64, scratch_operands = 1 : i64, tpu.core_type = #tpu.core_type<tc>, window_params = [{transform_indices = @transform_0, window_bounds = array<i64: 8, 128>}, {transform_indices = @transform_1, window_bounds = array<i64: 128, 128>}, {transform_indices = @transform_2, window_bounds = array<i64: 1, 128>}, {transform_indices = @transform_3, window_bounds = array<i64: 8, 128>}]} {
    %c0 = arith.constant 0 : index
    %c0_0 = arith.constant 0 : index
    %0 = vector.load %arg3[%c0, %c0_0] : memref<8x128xf32, #tpu.memory_space<vmem>>, vector<8x128xf32>
    %c0_1 = arith.constant 0 : index
    %c0_2 = arith.constant 0 : index
    %1 = vector.load %arg4[%c0_1, %c0_2] : memref<128x128xf32, #tpu.memory_space<vmem>>, vector<128x128xf32>
    %cst = arith.constant dense<0.000000e+00> : vector<8x128xf32>
    %2 = tpu.matmul %0, %1, %cst {dimension_numbers = #tpu.dot_dimension_numbers<[1], [0], [0], [1], [0, 0, 1, 1], [], []>} : vector<8x128xf32>, vector<128x128xf32>, vector<8x128xf32> -> vector<8x128xf32>
    %c0_3 = arith.constant 0 : index
    %c0_4 = arith.constant 0 : index
    %3 = vector.load %arg5[%c0_3, %c0_4] : memref<1x128xf32, #tpu.memory_space<vmem>>, vector<1x128xf32>
    %4 = vector.broadcast %3 : vector<1x128xf32> to vector<8x128xf32>
    %5 = arith.addf %2, %4 : vector<8x128xf32>
    %cst_5 = arith.constant 0.000000e+00 : f32
    %6 = vector.broadcast %cst_5 : f32 to vector<8x128xf32>
    %7 = arith.maximumf %5, %6 : vector<8x128xf32>
    %c0_6 = arith.constant 0 : index
    %c0_7 = arith.constant 0 : index
    %8 = vector.load %arg6[%c0_6, %c0_7] : memref<8x128xf32, #tpu.memory_space<vmem>>, vector<8x128xf32>
    tpu.vector_store %arg6[%c0_6, %c0_7], %7 {strides = array<i32>} : memref<8x128xf32, #tpu.memory_space<vmem>>, vector<8x128xf32>,
    return
  }
  func.func @transform_0(%arg0: i32, %arg1: i32, %arg2: i32) -> (i32, i32) {
    %c0_i32 = arith.constant 0 : i32
    return %arg0, %arg2 : i32, i32
  }
  func.func @transform_1(%arg0: i32, %arg1: i32, %arg2: i32) -> (i32, i32) {
    %c0_i32 = arith.constant 0 : i32
    return %arg2, %arg1 : i32, i32
  }
  func.func @transform_2(%arg0: i32, %arg1: i32, %arg2: i32) -> (i32, i32) {
    %c0_i32 = arith.constant 0 : i32
    %c0_i32_0 = arith.constant 0 : i32
    return %c0_i32, %arg1 : i32, i32
  }
  func.func @transform_3(%arg0: i32, %arg1: i32, %arg2: i32) -> (i32, i32) {
    %c0_i32 = arith.constant 0 : i32
    return %arg0, %arg1 : i32, i32
  }
}

</mosaic_0001>

<llo_original>
// kernel: tpu_custom_call.1
$region0: #{tpu_custom_call.1}
  #allocation0 [shape = 'u32[]', space=smem, size = 0x4, offset = 0x4, fixed_abs, tag = 'smem constant byte address 0x4 - core index']
  #allocation1 [shape = 'u32[144,128]{1,0:T(1,128)}', space=vmem, size = 0x12000, scoped, tag = 'internal scratch']
  #allocation2 [shape = 'f32[8,128]{1,0:T(8,128)}', space=vmem, size = 0x1000, scoped, tag = 'scratch operand']
  %s0 = inlined_call_operand.hbm [shape: f32[8,128], index: 0, kind: input, shape index: {}]
  %s1 = inlined_call_operand.hbm [shape: f32[128,128], index: 1, kind: input, shape index: {}]
  %s2 = inlined_call_operand.vmem [shape: f32[1,128], index: 2, kind: input, shape index: {}]
  %s3 = inlined_call_operand.hbm [shape: f32[8,128], index: 3, kind: output, shape index: {}]
  %s4 = sld [smem:[#allocation0]]
  $region30: #{tpu_custom_call.1} parent=0
    _
  %s6 = ssub.s32 1, %s4
  %s7 = scalar_select 0, %s6, %s4
  $region1: #{tpu_custom_call.1} parent=0
    #allocation3 [shape = 'u8[4096]{0}', space=vmem, size = 0x1000, scoped, tag = 'input window, operand 0, single buffered']
    #allocation4 [shape = 's32[1]{0}', space=sflag, size = 0x4, scoped, tag = 'scoped memory for tpu_custom_call.1']
    #allocation5 [shape = 's32[1]{0}', space=sflag, size = 0x4, scoped, tag = 'scoped memory for tpu_custom_call.1']
    #allocation6 [shape = 'u8[65536]{0}', space=vmem, size = 0x10000, scoped, tag = 'input window, operand 1, single buffered']
    #allocation7 [shape = 's32[1]{0}', space=sflag, size = 0x4, scoped, tag = 'scoped memory for tpu_custom_call.1']
    #allocation8 [shape = 'u8[4096]{0}', space=vmem, size = 0x1000, scoped, tag = 'output window, operand 0, single buffered']
    %8 = vsyncpa [#allocation4], 0
    %9 = vsyncpa [#allocation7], 0
    %10 = vsyncpa [#allocation5], 0
    // Predicated region
    $region2: #{tpu_custom_call.1} parent=1 // pred_check
      _
    $region3: #{tpu_custom_call.1} parent=1 // pred_check_branch
      %12 = sbr.rel (0) target = $region5
    $region4: #{tpu_custom_call.1} parent=1 // pred_region
      %s14 = ssub.s32 128, 128
      %15 = vsyncadd [#allocation4], %s14
      %s17 = sshll.u32 [#allocation3], 4
      %s18 = int_to_ptr.vmem [resolvable:$true] %s17
      %20 = dma.hbm_to_vmem [thread:$0]  %s0, 128, %s18, [#allocation4]
    $region5: #{tpu_custom_call.1} parent=1 // pred_fallthru
      _
    // Predicated region
    $region6: #{tpu_custom_call.1} parent=1 // pred_check
      _
    $region7: #{tpu_custom_call.1} parent=1 // pred_check_branch
      %22 = sbr.rel (0) target = $region9
    $region8: #{tpu_custom_call.1} parent=1 // pred_region
      %s24 = ssub.s32 2048, 2048
      %25 = vsyncadd [#allocation7], %s24
      %s26 = sshll.u32 [#allocation6], 4
      %s27 = int_to_ptr.vmem [resolvable:$true] %s26
      %32 = dma.hbm_to_vmem [thread:$0]  %s1, 2048, %s27, [#allocation7], 128, 128, 8
    $region9: #{tpu_custom_call.1} parent=1 // pred_fallthru
      _
    // Predicated region
    $region10: #{tpu_custom_call.1} parent=1 // pred_check
      _
    $region11: #{tpu_custom_call.1} parent=1 // pred_check_branch
      %34 = sbr.rel (0) target = $region13
    $region12: #{tpu_custom_call.1} parent=1 // pred_region
      _
    $region13: #{tpu_custom_call.1} parent=1 // pred_fallthru
      _
    // Predicated region
    $region14: #{tpu_custom_call.1} parent=1 // pred_check
      _
    $region15: #{tpu_custom_call.1} parent=1 // pred_check_branch
      %36 = sbr.rel (0) target = $region17
    $region16: #{tpu_custom_call.1} parent=1 // pred_region
      %37 = dma.done [#allocation4], 128
    $region17: #{tpu_custom_call.1} parent=1 // pred_fallthru
      _
    // Predicated region
    $region18: #{tpu_custom_call.1} parent=1 // pred_check
      _
    $region19: #{tpu_custom_call.1} parent=1 // pred_check_branch
      %39 = sbr.rel (0) target = $region21
    $region20: #{tpu_custom_call.1} parent=1 // pred_region
      %40 = dma.done [#allocation7], 2048
    $region21: #{tpu_custom_call.1} parent=1 // pred_fallthru
      _
    %v41 = vld [vmem:[#allocation3] sm:$0xff]
    %v42 = vld [vmem:[#allocation6] sm:$0xff]
    %v43 = vld [vmem:[#allocation6 + $0x8] sm:$0xff]
    %v44 = vld [vmem:[#allocation6 + $0x10] sm:$0xff]
    %v45 = vld [vmem:[#allocation6 + $0x18] sm:$0xff]
    %v46 = vld [vmem:[#allocation6 + $0x20] sm:$0xff]
    %v47 = vld [vmem:[#allocation6 + $0x28] sm:$0xff]
    %v48 = vld [vmem:[#allocation6 + $0x30] sm:$0xff]
    %v49 = vld [vmem:[#allocation6 + $0x38] sm:$0xff]
    %v50 = vld [vmem:[#allocation6 + $0x40] sm:$0xff]
    %v51 = vld [vmem:[#allocation6 + $0x48] sm:$0xff]
    %v52 = vld [vmem:[#allocation6 + $0x50] sm:$0xff]
    %v53 = vld [vmem:[#allocation6 + $0x58] sm:$0xff]
    %v54 = vld [vmem:[#allocation6 + $0x60] sm:$0xff]
    %v55 = vld [vmem:[#allocation6 + $0x68] sm:$0xff]
    %v56 = vld [vmem:[#allocation6 + $0x70] sm:$0xff]
    %v57 = vld [vmem:[#allocation6 + $0x78] sm:$0xff]
    %v58 = vld [vmem:[%s2] sm:$0x1]
    %v60 = vlaneseq
    %v61 = vshrl.u32 %v60, 7
    %v62 = vsub.s32 0, %v61
    %v63 = vrot.slane %v58, %v62
    %65 = vmatprep.subr.mxu0 0.0
    %66 = vmatpush1.msra.mxu0 %v42
    %67 = vmatprep.subr.mxu0 0.0
    %68 = vmatpush1.msra.mxu0 %v43
    %69 = vmatprep.subr.mxu0 0.0
    %70 = vmatpush1.msra.mxu0 %v44
    %71 = vmatprep.subr.mxu0 0.0
    %72 = vmatpush1.msra.mxu0 %v45
    %73 = vmatprep.subr.mxu0 0.0
    %74 = vmatpush1.msra.mxu0 %v46
    %75 = vmatprep.subr.mxu0 0.0
    %76 = vmatpush1.msra.mxu0 %v47
    %77 = vmatprep.subr.mxu0 0.0
    %78 = vmatpush1.msra.mxu0 %v48
    %79 = vmatprep.subr.mxu0 0.0
    %80 = vmatpush1.msra.mxu0 %v49
    %81 = vmatprep.subr.mxu0 0.0
    %82 = vmatpush1.msra.mxu0 %v50
    %83 = vmatprep.subr.mxu0 0.0
    %84 = vmatpush1.msra.mxu0 %v51
    %85 = vmatprep.subr.mxu0 0.0
    %86 = vmatpush1.msra.mxu0 %v52
    %87 = vmatprep.subr.mxu0 0.0
    %88 = vmatpush1.msra.mxu0 %v53
    %89 = vmatprep.subr.mxu0 0.0
    %90 = vmatpush1.msra.mxu0 %v54
    %91 = vmatprep.subr.mxu0 0.0
    %92 = vmatpush1.msra.mxu0 %v55
    %93 = vmatprep.subr.mxu0 0.0
    %94 = vmatpush1.msra.mxu0 %v56
    %95 = vmatprep.subr.mxu0 0.0
    %96 = vmatpush1.msra.mxu0 %v57
    %97 = vmatprep.subr.mxu0 0.0
    %98 = vmatpush1.msra.mxu0 0.0
    %99 = vmatprep.subr.mxu0 0.0
    %100 = vmatpush1.msra.mxu0 0.0
    %101 = vmatprep.subr.mxu0 0.0
    %102 = vmatpush1.msra.mxu0 0.0
    %103 = vmatprep.subr.mxu0 0.0
    %104 = vmatpush1.msra.mxu0 0.0
    %105 = vmatprep.subr.mxu0 0.0
    %106 = vmatpush1.msra.mxu0 0.0
    %107 = vmatprep.subr.mxu0 0.0
    %108 = vmatpush1.msra.mxu0 0.0
    %109 = vmatprep.subr.mxu0 0.0
    %110 = vmatpush1.msra.mxu0 0.0
    %111 = vmatprep.subr.mxu0 0.0
    %112 = vmatpush1.msra.mxu0 0.0
    %113 = vmatprep.subr.mxu0 0.0
    %114 = vmatpush1.msra.mxu0 0.0
    %115 = vmatprep.subr.mxu0 0.0
    %116 = vmatpush1.msra.mxu0 0.0
    %117 = vmatprep.subr.mxu0 0.0
    %118 = vmatpush1.msra.mxu0 0.0
    %119 = vmatprep.subr.mxu0 0.0
    %120 = vmatpush1.msra.mxu0 0.0
    %121 = vmatprep.subr.mxu0 0.0
    %122 = vmatpush1.msra.mxu0 0.0
    %123 = vmatprep.subr.mxu0 0.0
    %124 = vmatpush1.msra.mxu0 0.0
    %125 = vmatprep.subr.mxu0 0.0
    %126 = vmatpush1.msra.mxu0 0.0
    %127 = vmatprep.subr.mxu0 0.0
    %128 = vmatpush1.msra.mxu0 0.0
    %129 = vmatprep.mubr.f32.mxu0 0.0
    %130 = vmatmul.mubr.f32.gmra.mrb[0].mxu0 %v41
    %v131 = vpop.f32.mrb[0].mxu0
    %v132 = vadd.f32 %v63, %v131
    %v133 = vpop.f32.mrb[0].mxu0
    %134 = vdwg.mxu0
    %v135 = vmax.f32 %v132, 0.0
    %136 = vst [vmem:[#allocation8] sm:$0xff] %v135
    // Predicated region
    $region22: #{tpu_custom_call.1} parent=1 // pred_check
      _
    $region23: #{tpu_custom_call.1} parent=1 // pred_check_branch
      %138 = sbr.rel (0) target = $region25
    $region24: #{tpu_custom_call.1} parent=1 // pred_region
      %s140 = ssub.s32 128, 128
      %141 = vsyncadd [#allocation5], %s140
      %s143 = sshll.u32 [#allocation8], 4
      %s144 = int_to_ptr.vmem [resolvable:$true] %s143
      %146 = dma.vmem_to_hbm [thread:$0]  %s144, 128, %s3, [#allocation5]
    $region25: #{tpu_custom_call.1} parent=1 // pred_fallthru
      _
    // Predicated region
    $region26: #{tpu_custom_call.1} parent=1 // pred_check
      _
    $region27: #{tpu_custom_call.1} parent=1 // pred_check_branch
      %148 = sbr.rel (0) target = $region29
    $region28: #{tpu_custom_call.1} parent=1 // pred_region
      %149 = dma.done [#allocation5], 128
    $region29: #{tpu_custom_call.1} parent=1 // pred_fallthru
      _
    %150 = vsyncpa [#allocation4], 1
    %151 = vsyncpa [#allocation7], 1
    %152 = vsyncpa [#allocation5], 1

</llo_original>
